<compile_context>
chip_gen: v5e
topology: v5e:2x2
jax: 0.10.0
libtpu: 0.0.40
codegen_flags: <defaults>
</compile_context>

<pallas_src>
import functools

import jax
import jax.numpy as jnp
from jax.experimental import pallas as pl
from jax.experimental.pallas import tpu as pltpu


# ------------------------------- helpers ----------------------------------- #

def _round_up(x, m):
    return ((x + m - 1) // m) * m


def _pad_axis(x, axis, target):
    pad = target - x.shape[axis]
    if pad <= 0:
        return x
    widths = [(0, 0)] * x.ndim
    widths[axis] = (0, pad)
    return jnp.pad(x, widths)


def _vmem_limit_bytes():
    # Per-generation VMEM knob (review): ~80% of physical, capped at 110 MiB.
    # v5e/v6e (128 MiB) -> ~102 MiB, v7x (64 MiB) -> ~51 MiB.
    try:
        info = pltpu.get_tpu_info()
        cap = int(getattr(info, "vmem_capacity_bytes", 64 * 1024 * 1024))
    except Exception:
        cap = 64 * 1024 * 1024
    return min((cap * 4) // 5, 110 * 1024 * 1024)


# ----------------------------- Pallas kernel ------------------------------- #

def fused_gin_kernel(adj_ref, h0_ref, eagg_ref, w1_ref, b1_ref, w2_ref, b2_ref,
                     pw_ref, pb_ref, out_ref, h_scratch):
    """One grid step == (one graph group, one GIN layer).

    The group axis is "parallel" (shards across TensorCores); the layer axis is
    "arbitrary" and carries the node features h in a bf16 VMEM scratch.
    """
    l = pl.program_id(1)
    n_layers = pl.num_programs(1)

    # Layer 0: load this group's initial node embeddings into the resident scratch.
    @pl.when(l == 0)
    def _():
        h_scratch[...] = h0_ref[...]

    h = h_scratch[...]                               # bf16 (M_tile, D_pad)

    # Message passing (block-diagonal adjacency within the group):
    #   agg[v] = sum_{e: dst(e)=v} h[src(e)] + edge_emb[e] = (A @ h)[v] + eagg[v]
    agg = jnp.dot(adj_ref[...], h, preferred_element_type=jnp.float32)
    agg = agg + eagg_ref[...].astype(jnp.float32)

    # MLP: Linear(D, 2D) -> ReLU -> Linear(2D, D); eval BN folded into w2/b2.
    h1 = jnp.dot(agg.astype(jnp.bfloat16), w1_ref[...],
                 preferred_element_type=jnp.float32) + b1_ref[...]
    h1 = jnp.maximum(h1, 0.0)
    h2 = jnp.dot(h1.astype(jnp.bfloat16), w2_ref[...],
                 preferred_element_type=jnp.float32) + b2_ref[...]

    is_last = l == n_layers - 1

    # Intermediate layers: ReLU and carry h forward in VMEM (bf16 scratch).
    @pl.when(jnp.logical_not(is_last))
    def _():
        h_scratch[...] = jnp.maximum(h2, 0.0).astype(jnp.bfloat16)

    # Last layer (JK='last', no activation): fused per-node prediction head.
    # Output slab is lane-dense (M_tile, 128) bf16; sliced to n_tasks in the wrapper.
    @pl.when(is_last)
    def _():
        out_ref[...] = (jnp.dot(h2.astype(jnp.bfloat16), pw_ref[...],
                                preferred_element_type=jnp.float32)
                        + pb_ref[...]).astype(out_ref.dtype)


def ginp_fused_call(adj_bd, h0, eagg_all, w1_all, b1_all, w2_all, b2_all, pw, pb):
    num_layers = eagg_all.shape[0]
    num_groups, m_tile, d_pad = h0.shape
    h_pad = w1_all.shape[2]
    t_pad = pw.shape[1]

    # Note: adj/h0/pw/pb are invariant along the layer axis; single-buffering them
    # (pipeline_mode=pl.Buffered(1)) would trim VMEM further at large N.
    grid_spec = pltpu.PrefetchScalarGridSpec(
        num_scalar_prefetch=0,
        grid=(num_groups, num_layers),
        in_specs=[
            pl.BlockSpec((None, m_tile, m_tile), lambda g, l: (g, 0, 0)),   # block-diag adjacency (bf16)
            pl.BlockSpec((None, m_tile, d_pad), lambda g, l: (g, 0, 0)),    # h0 per group (bf16)
            pl.BlockSpec((None, None, m_tile, d_pad), lambda g, l: (l, g, 0, 0)),  # eagg per (layer, group)
            pl.BlockSpec((None, d_pad, h_pad), lambda g, l: (l, 0, 0)),     # w1 per layer (bf16)
            pl.BlockSpec((None, 1, h_pad), lambda g, l: (l, 0, 0)),         # b1 per layer (f32)
            pl.BlockSpec((None, h_pad, d_pad), lambda g, l: (l, 0, 0)),     # w2 per layer, BN-folded (bf16)
            pl.BlockSpec((None, 1, d_pad), lambda g, l: (l, 0, 0)),         # b2 per layer, BN-folded (f32)
            pl.BlockSpec((d_pad, t_pad), lambda g, l: (0, 0)),              # prediction W (bf16)
            pl.BlockSpec((1, t_pad), lambda g, l: (0, 0)),                  # prediction b (f32)
        ],
        out_specs=pl.BlockSpec((None, m_tile, t_pad), lambda g, l: (g, 0, 0)),
        scratch_shapes=[pltpu.VMEM((m_tile, d_pad), jnp.bfloat16)],         # resident h (bf16)
    )
    return pl.pallas_call(
        fused_gin_kernel,
        out_shape=jax.ShapeDtypeStruct((num_groups, m_tile, t_pad), jnp.bfloat16),
        grid_spec=grid_spec,
        compiler_params=pltpu.CompilerParams(
            # group axis shards across TensorCores; layer axis carries h in scratch
            dimension_semantics=("parallel", "arbitrary"),
            vmem_limit_bytes=_vmem_limit_bytes(),
        ),
    )(adj_bd, h0, eagg_all, w1_all, b1_all, w2_all, b2_all, pw, pb)


# ------------------------- parameter initialization ------------------------ #

def init_params(key, num_node_emb_list, num_edge_emb_list, num_layers, emb_dim, n_tasks):
    keys = iter(jax.random.split(key, 8 * num_layers + len(num_node_emb_list) + 4))
    params = {}
    params["node_emb"] = [
        0.1 * jax.random.normal(next(keys), (m, emb_dim), jnp.float32)
        for m in num_node_emb_list
    ]
    layers = []
    eps = 1e-5
    for _ in range(num_layers):
        lp = {}
        lp["edge_emb"] = [
            0.1 * jax.random.normal(next(keys), (m, emb_dim), jnp.float32)
            for m in num_edge_emb_list
        ]
        # nn.Linear stores weight as (out, in); we keep the transposed (in, out) layout.
        lp["w1"] = 0.1 * jax.random.normal(next(keys), (emb_dim, 2 * emb_dim), jnp.float32)
        lp["b1"] = 0.01 * jax.random.normal(next(keys), (1, 2 * emb_dim), jnp.float32)
        lp["w2"] = 0.1 * jax.random.normal(next(keys), (2 * emb_dim, emb_dim), jnp.float32)
        lp["b2"] = 0.01 * jax.random.normal(next(keys), (1, emb_dim), jnp.float32)
        # BatchNorm1d defaults: gamma=1, beta=0, running_mean=0, running_var=1, eps=1e-5
        gamma = jnp.ones((emb_dim,), jnp.float32)
        beta = jnp.zeros((emb_dim,), jnp.float32)
        rmean = jnp.zeros((emb_dim,), jnp.float32)
        rvar = jnp.ones((emb_dim,), jnp.float32)
        scale = gamma / jnp.sqrt(rvar + eps)
        shift = beta - rmean * scale
        lp["bn_scale"] = scale.reshape(1, emb_dim)
        lp["bn_shift"] = shift.reshape(1, emb_dim)
        layers.append(lp)
    params["layers"] = layers
    params["pred_w"] = 0.1 * jax.random.normal(next(keys), (emb_dim, n_tasks), jnp.float32)
    params["pred_b"] = 0.01 * jax.random.normal(next(keys), (1, n_tasks), jnp.float32)
    return params


# --------------------------------- forward --------------------------------- #

def ginp_forward(params, adj_b, dst_b, node_cat_b, edge_cat_b, *, graphs_per_group=8):
    """Batched forward over B graphs (each padded to Ng nodes).

    adj_b:      (B, Ng, Ng) dense adjacency with multiplicity, A[b, v, u] = #edges u->v
    dst_b:      (B, E)      destination node of each edge
    node_cat_b: (B, Ng, Kn) categorical node features
    edge_cat_b: (B, E, Ke)  categorical edge features
    Returns (B, Ng, n_tasks) per-node predictions; identical per graph to running the
    PyTorch module per graph (block-diagonal DGL-style batching).
    """
    b, ng = adj_b.shape[0], adj_b.shape[1]
    layers = params["layers"]
    emb_dim = params["node_emb"][0].shape[1]
    hid = layers[0]["w1"].shape[1]
    n_tasks = params["pred_w"].shape[1]

    # Lane-pad feature dims to 128.
    d_pad = _round_up(emb_dim, 128)
    h_pad = _round_up(hid, 128)
    t_pad = _round_up(n_tasks, 128)

    # Group graphs so each grid step's matmul M dimension fills the MXU rows.
    g = graphs_per_group
    ng_pad = _round_up(ng, 16)              # bf16 sublane alignment per graph block
    b_pad = _round_up(b, g)
    num_groups = b_pad // g
    m_tile = g * ng_pad                     # 8 * 16 = 128 MXU rows per grid step
    # TODO(synk): for very large graphs, add a node-row grid axis / sparse aggregation
    #             before the dense N^2 adjacency exceeds VMEM (~4-5k nodes on v7x).

    # ---- node embeddings -> h0 (bf16, grouped) ----
    h0 = sum(tbl[node_cat_b[..., i]] for i, tbl in enumerate(params["node_emb"]))
    h0 = _pad_axis(_pad_axis(_pad_axis(h0.astype(jnp.float32), 0, b_pad), 1, ng_pad), 2, d_pad)
    h0 = h0.reshape(num_groups, m_tile, d_pad).astype(jnp.bfloat16)

    # ---- per-layer edge aggregates (graph-only, independent of h) + folded weights ----
    eagg_list, w1_list, b1_list, w2_list, b2_list = [], [], [], [], []
    for lp in layers:
        edge_emb = sum(tbl[edge_cat_b[..., i]] for i, tbl in enumerate(lp["edge_emb"]))
        eagg = jax.vmap(
            lambda ee, d: jax.ops.segment_sum(ee, d, num_segments=ng)
        )(edge_emb.astype(jnp.float32), dst_b)
        eagg = _pad_axis(_pad_axis(_pad_axis(eagg, 0, b_pad), 1, ng_pad), 2, d_pad)
        eagg_list.append(eagg.reshape(num_groups, m_tile, d_pad).astype(jnp.bfloat16))

        # Fold eval-mode BatchNorm into Linear2: w2' = w2*scale, b2' = b2*scale + shift.
        scale = lp["bn_scale"].reshape(-1)
        shift = lp["bn_shift"].reshape(-1)
        w2f = lp["w2"] * scale[None, :]
        b2f = lp["b2"].reshape(-1) * scale + shift

        w1_list.append(_pad_axis(_pad_axis(lp["w1"], 0, d_pad), 1, h_pad).astype(jnp.bfloat16))
        b1_list.append(_pad_axis(lp["b1"].reshape(1, -1), 1, h_pad).astype(jnp.float32))
        w2_list.append(_pad_axis(_pad_axis(w2f, 0, h_pad), 1, d_pad).astype(jnp.bfloat16))
        b2_list.append(_pad_axis(b2f.reshape(1, -1), 1, d_pad).astype(jnp.float32))

    eagg_all = jnp.stack(eagg_list)          # (L, G#, M_tile, D_pad) bf16
    w1_all = jnp.stack(w1_list)              # (L, D_pad, H_pad)      bf16
    b1_all = jnp.stack(b1_list)              # (L, 1, H_pad)          f32
    w2_all = jnp.stack(w2_list)              # (L, H_pad, D_pad)      bf16
    b2_all = jnp.stack(b2_list)              # (L, 1, D_pad)          f32

    # ---- per-group block-diagonal adjacency (small integer counts, exact in bf16) ----
    adj_p = _pad_axis(_pad_axis(_pad_axis(adj_b.astype(jnp.float32), 0, b_pad), 1, ng_pad), 2, ng_pad)
    adj_grp = adj_p.reshape(num_groups, g, ng_pad, ng_pad)
    adj_bd = jnp.zeros((num_groups, m_tile, m_tile), jnp.float32)
    for i in range(g):
        adj_bd = adj_bd.at[:, i * ng_pad:(i + 1) * ng_pad,
                           i * ng_pad:(i + 1) * ng_pad].set(adj_grp[:, i])
    adj_bd = adj_bd.astype(jnp.bfloat16)

    pw = _pad_axis(_pad_axis(params["pred_w"], 0, d_pad), 1, t_pad).astype(jnp.bfloat16)
    pb = _pad_axis(params["pred_b"].reshape(1, -1), 1, t_pad).astype(jnp.float32)

    out_pad = ginp_fused_call(adj_bd, h0, eagg_all, w1_all, b1_all, w2_all,
                              b2_all, pw, pb)
    out = out_pad.reshape(b_pad, ng_pad, t_pad)[:b, :ng, :n_tasks].astype(jnp.float32)
    # TODO(synk): Dropout(p=0.5) is identity in eval mode; training-mode dropout not implemented.
    return out


# ------------------------ pure-JAX f32 reference (check) -------------------- #

def ginp_reference(params, adj_b, dst_b, node_cat_b, edge_cat_b):
    ng = adj_b.shape[1]
    n_layers = len(params["layers"])
    h = sum(tbl[node_cat_b[..., i]] for i, tbl in enumerate(params["node_emb"]))
    for li, lp in enumerate(params["layers"]):
        edge_emb = sum(tbl[edge_cat_b[..., i]] for i, tbl in enumerate(lp["edge_emb"]))
        eagg = jax.vmap(
            lambda ee, d: jax.ops.segment_sum(ee, d, num_segments=ng)
        )(edge_emb, dst_b)
        agg = jnp.einsum("bvu,bud->bvd", adj_b, h) + eagg
        h1 = jnp.maximum(agg @ lp["w1"] + lp["b1"], 0.0)
        h2 = h1 @ lp["w2"] + lp["b2"]
        h2 = h2 * lp["bn_scale"] + lp["bn_shift"]
        if li < n_layers - 1:
            h2 = jnp.maximum(h2, 0.0)
        h = h2
    return h @ params["pred_w"] + params["pred_b"]


# ----------------------------------- main ----------------------------------- #

if __name__ == "__main__":
    key = jax.random.PRNGKey(0)

    # Small synthetic batch of graphs / config.
    B, Ng, E = 16, 16, 48                 # 16 graphs x 16 nodes, 48 edges each
    emb_dim = 32
    num_layers = 3
    num_node_emb_list = [7, 4]
    num_edge_emb_list = [5, 3]
    n_tasks = 1
    graphs_per_group = 8                  # 8 graphs * 16 nodes = 128 MXU rows/step

    k_src, k_dst, k_nc0, k_nc1, k_ec0, k_ec1, k_par = jax.random.split(key, 7)
    src_b = jax.random.randint(k_src, (B, E), 0, Ng)
    dst_b = jax.random.randint(k_dst, (B, E), 0, Ng)
    node_cat_b = jnp.stack(
        [jax.random.randint(k, (B, Ng), 0, m)
         for k, m in zip((k_nc0, k_nc1), num_node_emb_list)], axis=-1)
    edge_cat_b = jnp.stack(
        [jax.random.randint(k, (B, E), 0, m)
         for k, m in zip((k_ec0, k_ec1), num_edge_emb_list)], axis=-1)

    # Dense per-graph adjacency with multiplicity: A[b, v, u] counts edges u->v.
    adj_b = jnp.zeros((B, Ng, Ng), jnp.float32).at[
        jnp.arange(B)[:, None], dst_b, src_b].add(1.0)

    params = init_params(k_par, num_node_emb_list, num_edge_emb_list,
                         num_layers, emb_dim, n_tasks)

    fwd = jax.jit(functools.partial(ginp_forward, graphs_per_group=graphs_per_group))
    out = fwd(params, adj_b, dst_b, node_cat_b, edge_cat_b)
    out = jax.block_until_ready(out)
    assert out.shape == (B, Ng, n_tasks), out.shape
    assert out.dtype == jnp.float32
    assert bool(jnp.all(jnp.isfinite(out)))

    # Sanity-check against a pure-JAX f32 reference (kernel is bf16 -> loose tolerance).
    ref = ginp_reference(params, adj_b, dst_b, node_cat_b, edge_cat_b)
    err = float(jnp.max(jnp.abs(out - ref)))
    tol = 0.1 * float(jnp.max(jnp.abs(ref))) + 2e-2
    assert err <= tol, (err, tol)

    print("KERNEL_OK")
</pallas_src>

<mosaic_0001>
module attributes {stable_mosaic.version = 11 : i64} {
  func.func @fused_gin_kernel(%arg0: i32, %arg1: i32, %arg2: memref<1x128x128xbf16, #tpu.memory_space<vmem>>, %arg3: memref<1x128x128xbf16, #tpu.memory_space<vmem>>, %arg4: memref<1x1x128x128xbf16, #tpu.memory_space<vmem>>, %arg5: memref<1x128x128xbf16, #tpu.memory_space<vmem>>, %arg6: memref<1x1x128xf32, #tpu.memory_space<vmem>>, %arg7: memref<1x128x128xbf16, #tpu.memory_space<vmem>>, %arg8: memref<1x1x128xf32, #tpu.memory_space<vmem>>, %arg9: memref<128x128xbf16, #tpu.memory_space<vmem>>, %arg10: memref<1x128xf32, #tpu.memory_space<vmem>>, %arg11: memref<1x128x128xbf16, #tpu.memory_space<vmem>>, %arg12: memref<128x128xbf16, #tpu.memory_space<vmem>>) attributes {dimension_semantics = [#tpu.dimension_semantics<parallel>, #tpu.dimension_semantics<arbitrary>], iteration_bounds = array<i64: 2, 3>, scalar_prefetch = 0 : i64, scratch_operands = 1 : i64, tpu.core_type = #tpu.core_type<tc>, window_params = [{transform_indices = @transform_0, window_bounds = array<i64: 1, 128, 128>}, {transform_indices = @transform_1, window_bounds = array<i64: 1, 128, 128>}, {transform_indices = @transform_2, window_bounds = array<i64: 1, 1, 128, 128>}, {transform_indices = @transform_3, window_bounds = array<i64: 1, 128, 128>}, {transform_indices = @transform_4, window_bounds = array<i64: 1, 1, 128>}, {transform_indices = @transform_5, window_bounds = array<i64: 1, 128, 128>}, {transform_indices = @transform_6, window_bounds = array<i64: 1, 1, 128>}, {pipeline_mode = #tpu.pipeline_mode<synchronous>, transform_indices = @transform_7, window_bounds = array<i64: 128, 128>}, {pipeline_mode = #tpu.pipeline_mode<synchronous>, transform_indices = @transform_8, window_bounds = array<i64: 1, 128>}, {transform_indices = @transform_9, window_bounds = array<i64: 1, 128, 128>}]} {
    %c0_i32 = arith.constant 0 : i32
    %0 = arith.cmpi eq, %arg1, %c0_i32 : i32
    %1 = arith.extui %0 : i1 to i32
    %c0_i32_0 = arith.constant 0 : i32
    %2 = arith.cmpi ne, %1, %c0_i32_0 : i32
    scf.if %2 {
      %c0_26 = arith.constant 0 : index
      %c0_27 = arith.constant 0 : index
      %c0_28 = arith.constant 0 : index
      %35 = vector.load %arg3[%c0_26, %c0_27, %c0_28] : memref<1x128x128xbf16, #tpu.memory_space<vmem>>, vector<1x128x128xbf16>
      %36 = vector.shape_cast %35 : vector<1x128x128xbf16> to vector<128x128xbf16>
      %c0_29 = arith.constant 0 : index
      %c0_30 = arith.constant 0 : index
      %37 = vector.load %arg12[%c0_29, %c0_30] : memref<128x128xbf16, #tpu.memory_space<vmem>>, vector<128x128xbf16>
      tpu.vector_store %arg12[%c0_29, %c0_30], %36 {strides = array<i32>} : memref<128x128xbf16, #tpu.memory_space<vmem>>, vector<128x128xbf16>,
    } else {
    }
    %c0 = arith.constant 0 : index
    %c0_1 = arith.constant 0 : index
    %3 = vector.load %arg12[%c0, %c0_1] : memref<128x128xbf16, #tpu.memory_space<vmem>>, vector<128x128xbf16>
    %c0_2 = arith.constant 0 : index
    %c0_3 = arith.constant 0 : index
    %c0_4 = arith.constant 0 : index
    %4 = vector.load %arg2[%c0_2, %c0_3, %c0_4] : memref<1x128x128xbf16, #tpu.memory_space<vmem>>, vector<1x128x128xbf16>
    %5 = vector.shape_cast %4 : vector<1x128x128xbf16> to vector<128x128xbf16>
    %cst = arith.constant dense<0.000000e+00> : vector<128x128xf32>
    %6 = tpu.matmul %5, %3, %cst {dimension_numbers = #tpu.dot_dimension_numbers<[1], [0], [0], [1], [0, 0, 1, 1], [], []>} : vector<128x128xbf16>, vector<128x128xbf16>, vector<128x128xf32> -> vector<128x128xf32>
    %c0_5 = arith.constant 0 : index
    %c0_6 = arith.constant 0 : index
    %c0_7 = arith.constant 0 : index
    %c0_8 = arith.constant 0 : index
    %7 = vector.load %arg4[%c0_5, %c0_6, %c0_7, %c0_8] : memref<1x1x128x128xbf16, #tpu.memory_space<vmem>>, vector<1x1x128x128xbf16>
    %8 = vector.shape_cast %7 : vector<1x1x128x128xbf16> to vector<128x128xbf16>
    %9 = arith.extf %8 : vector<128x128xbf16> to vector<128x128xf32>
    %10 = arith.addf %6, %9 : vector<128x128xf32>
    %11 = arith.truncf %10 : vector<128x128xf32> to vector<128x128xbf16>
    %c0_9 = arith.constant 0 : index
    %c0_10 = arith.constant 0 : index
    %c0_11 = arith.constant 0 : index
    %12 = vector.load %arg5[%c0_9, %c0_10, %c0_11] : memref<1x128x128xbf16, #tpu.memory_space<vmem>>, vector<1x128x128xbf16>
    %13 = vector.shape_cast %12 : vector<1x128x128xbf16> to vector<128x128xbf16>
    %cst_12 = arith.constant dense<0.000000e+00> : vector<128x128xf32>
    %14 = tpu.matmul %11, %13, %cst_12 {dimension_numbers = #tpu.dot_dimension_numbers<[1], [0], [0], [1], [0, 0, 1, 1], [], []>} : vector<128x128xbf16>, vector<128x128xbf16>, vector<128x128xf32> -> vector<128x128xf32>
    %c0_13 = arith.constant 0 : index
    %c0_14 = arith.constant 0 : index
    %c0_15 = arith.constant 0 : index
    %15 = vector.load %arg6[%c0_13, %c0_14, %c0_15] : memref<1x1x128xf32, #tpu.memory_space<vmem>>, vector<1x1x128xf32>
    %16 = vector.shape_cast %15 : vector<1x1x128xf32> to vector<1x128xf32>
    %17 = vector.broadcast %16 : vector<1x128xf32> to vector<128x128xf32>
    %18 = arith.addf %14, %17 : vector<128x128xf32>
    %cst_16 = arith.constant 0.000000e+00 : f32
    %19 = vector.broadcast %cst_16 : f32 to vector<128x128xf32>
    %20 = arith.maximumf %18, %19 : vector<128x128xf32>
    %21 = arith.truncf %20 : vector<128x128xf32> to vector<128x128xbf16>
    %c0_17 = arith.constant 0 : index
    %c0_18 = arith.constant 0 : index
    %c0_19 = arith.constant 0 : index
    %22 = vector.load %arg7[%c0_17, %c0_18, %c0_19] : memref<1x128x128xbf16, #tpu.memory_space<vmem>>, vector<1x128x128xbf16>
    %23 = vector.shape_cast %22 : vector<1x128x128xbf16> to vector<128x128xbf16>
    %cst_20 = arith.constant dense<0.000000e+00> : vector<128x128xf32>
    %24 = tpu.matmul %21, %23, %cst_20 {dimension_numbers = #tpu.dot_dimension_numbers<[1], [0], [0], [1], [0, 0, 1, 1], [], []>} : vector<128x128xbf16>, vector<128x128xbf16>, vector<128x128xf32> -> vector<128x128xf32>
    %c0_21 = arith.constant 0 : index
    %c0_22 = arith.constant 0 : index
    %c0_23 = arith.constant 0 : index
    %25 = vector.load %arg8[%c0_21, %c0_22, %c0_23] : memref<1x1x128xf32, #tpu.memory_space<vmem>>, vector<1x1x128xf32>
    %26 = vector.shape_cast %25 : vector<1x1x128xf32> to vector<1x128xf32>
    %27 = vector.broadcast %26 : vector<1x128xf32> to vector<128x128xf32>
    %28 = arith.addf %24, %27 : vector<128x128xf32>
    %c2_i32 = arith.constant 2 : i32
    %29 = arith.cmpi eq, %arg1, %c2_i32 : i32
    %true = arith.constant true
    %30 = arith.xori %29, %true : i1
    %31 = arith.extui %30 : i1 to i32
    %c0_i32_24 = arith.constant 0 : i32
    %32 = arith.cmpi ne, %31, %c0_i32_24 : i32
    scf.if %32 {
      %cst_26 = arith.constant 0.000000e+00 : f32
      %35 = vector.broadcast %cst_26 : f32 to vector<128x128xf32>
      %36 = arith.maximumf %28, %35 : vector<128x128xf32>
      %37 = arith.truncf %36 : vector<128x128xf32> to vector<128x128xbf16>
      %c0_27 = arith.constant 0 : index
      %c0_28 = arith.constant 0 : index
      %38 = vector.load %arg12[%c0_27, %c0_28] : memref<128x128xbf16, #tpu.memory_space<vmem>>, vector<128x128xbf16>
      tpu.vector_store %arg12[%c0_27, %c0_28], %37 {strides = array<i32>} : memref<128x128xbf16, #tpu.memory_space<vmem>>, vector<128x128xbf16>,
    } else {
    }
    %33 = arith.extui %29 : i1 to i32
    %c0_i32_25 = arith.constant 0 : i32
    %34 = arith.cmpi ne, %33, %c0_i32_25 : i32
    scf.if %34 {
      %35 = arith.truncf %28 : vector<128x128xf32> to vector<128x128xbf16>
      %c0_26 = arith.constant 0 : index
      %c0_27 = arith.constant 0 : index
      %36 = vector.load %arg9[%c0_26, %c0_27] : memref<128x128xbf16, #tpu.memory_space<vmem>>, vector<128x128xbf16>
      %cst_28 = arith.constant dense<0.000000e+00> : vector<128x128xf32>
      %37 = tpu.matmul %35, %36, %cst_28 {dimension_numbers = #tpu.dot_dimension_numbers<[1], [0], [0], [1], [0, 0, 1, 1], [], []>} : vector<128x128xbf16>, vector<128x128xbf16>, vector<128x128xf32> -> vector<128x128xf32>
      %c0_29 = arith.constant 0 : index
      %c0_30 = arith.constant 0 : index
      %38 = vector.load %arg10[%c0_29, %c0_30] : memref<1x128xf32, #tpu.memory_space<vmem>>, vector<1x128xf32>
      %39 = vector.broadcast %38 : vector<1x128xf32> to vector<128x128xf32>
      %40 = arith.addf %37, %39 : vector<128x128xf32>
      %41 = arith.truncf %40 : vector<128x128xf32> to vector<128x128xbf16>
      %c0_31 = arith.constant 0 : index
      %c0_32 = arith.constant 0 : index
      %c0_33 = arith.constant 0 : index
      %42 = vector.load %arg11[%c0_31, %c0_32, %c0_33] : memref<1x128x128xbf16, #tpu.memory_space<vmem>>, vector<1x128x128xbf16>
      %43 = vector.shape_cast %42 : vector<1x128x128xbf16> to vector<128x128xbf16>
      %44 = vector.shape_cast %41 : vector<128x128xbf16> to vector<1x128x128xbf16>
      tpu.vector_store %arg11[%c0_31, %c0_32, %c0_33], %44 {strides = array<i32>} : memref<1x128x128xbf16, #tpu.memory_space<vmem>>, vector<1x128x128xbf16>,
    } else {
    }
    return
  }
  func.func @transform_0(%arg0: i32, %arg1: i32) -> (i32, i32, i32) {
    %c0_i32 = arith.constant 0 : i32
    %c0_i32_0 = arith.constant 0 : i32
    %c0_i32_1 = arith.constant 0 : i32
    return %arg0, %c0_i32, %c0_i32_0 : i32, i32, i32
  }
  func.func @transform_1(%arg0: i32, %arg1: i32) -> (i32, i32, i32) {
    %c0_i32 = arith.constant 0 : i32
    %c0_i32_0 = arith.constant 0 : i32
    %c0_i32_1 = arith.constant 0 : i32
    return %arg0, %c0_i32, %c0_i32_0 : i32, i32, i32
  }
  func.func @transform_2(%arg0: i32, %arg1: i32) -> (i32, i32, i32, i32) {
    %c0_i32 = arith.constant 0 : i32
    %c0_i32_0 = arith.constant 0 : i32
    %c0_i32_1 = arith.constant 0 : i32
    return %arg1, %arg0, %c0_i32, %c0_i32_0 : i32, i32, i32, i32
  }
  func.func @transform_3(%arg0: i32, %arg1: i32) -> (i32, i32, i32) {
    %c0_i32 = arith.constant 0 : i32
    %c0_i32_0 = arith.constant 0 : i32
    %c0_i32_1 = arith.constant 0 : i32
    return %arg1, %c0_i32, %c0_i32_0 : i32, i32, i32
  }
  func.func @transform_4(%arg0: i32, %arg1: i32) -> (i32, i32, i32) {
    %c0_i32 = arith.constant 0 : i32
    %c0_i32_0 = arith.constant 0 : i32
    %c0_i32_1 = arith.constant 0 : i32
    return %arg1, %c0_i32, %c0_i32_0 : i32, i32, i32
  }
  func.func @transform_5(%arg0: i32, %arg1: i32) -> (i32, i32, i32) {
    %c0_i32 = arith.constant 0 : i32
    %c0_i32_0 = arith.constant 0 : i32
    %c0_i32_1 = arith.constant 0 : i32
    return %arg1, %c0_i32, %c0_i32_0 : i32, i32, i32
  }
  func.func @transform_6(%arg0: i32, %arg1: i32) -> (i32, i32, i32) {
    %c0_i32 = arith.constant 0 : i32
    %c0_i32_0 = arith.constant 0 : i32
    %c0_i32_1 = arith.constant 0 : i32
    return %arg1, %c0_i32, %c0_i32_0 : i32, i32, i32
  }
  func.func @transform_7(%arg0: i32, %arg1: i32) -> (i32, i32) {
    %c0_i32 = arith.constant 0 : i32
    %c0_i32_0 = arith.constant 0 : i32
    %c0_i32_1 = arith.constant 0 : i32
    return %c0_i32, %c0_i32_0 : i32, i32
  }
  func.func @transform_8(%arg0: i32, %arg1: i32) -> (i32, i32) {
    %c0_i32 = arith.constant 0 : i32
    %c0_i32_0 = arith.constant 0 : i32
    %c0_i32_1 = arith.constant 0 : i32
    return %c0_i32, %c0_i32_0 : i32, i32
  }
  func.func @transform_9(%arg0: i32, %arg1: i32) -> (i32, i32, i32) {
    %c0_i32 = arith.constant 0 : i32
    %c0_i32_0 = arith.constant 0 : i32
    %c0_i32_1 = arith.constant 0 : i32
    return %arg0, %c0_i32, %c0_i32_0 : i32, i32, i32
  }
}

</mosaic_0001>

<llo_original>
// kernel: ginp_forward.1
$region0: #{ginp_forward.1}
  #allocation0 [shape = 'u32[]', space=smem, size = 0x4, offset = 0x4, fixed_abs, tag = 'smem constant byte address 0x4 - core index']
  #allocation1 [shape = 'u32[72,128]{1,0:T(1,128)}', space=vmem, size = 0x9000, scoped, tag = 'internal scratch']
  #allocation2 [shape = 'bf16[128,128]{1,0:T(8,128)(2,1)}', space=vmem, size = 0x8000, scoped, tag = 'scratch operand']
  %s0 = inlined_call_operand.vmem [shape: bf16[2,128,128], index: 0, kind: input, shape index: {}]
  %s1 = inlined_call_operand.vmem [shape: bf16[2,128,128], index: 1, kind: input, shape index: {}]
  %s2 = inlined_call_operand.vmem [shape: bf16[3,2,128,128], index: 2, kind: input, shape index: {}]
  %s3 = inlined_call_operand.vmem [shape: bf16[3,128,128], index: 3, kind: input, shape index: {}]
  %s4 = inlined_call_operand.vmem [shape: f32[3,1,128], index: 4, kind: input, shape index: {}]
  %s5 = inlined_call_operand.vmem [shape: bf16[3,128,128], index: 5, kind: input, shape index: {}]
  %s6 = inlined_call_operand.vmem [shape: f32[3,1,128], index: 6, kind: input, shape index: {}]
  %s7 = inlined_call_operand.vmem [shape: bf16[128,128], index: 7, kind: input, shape index: {}]
  %s8 = inlined_call_operand.vmem [shape: f32[1,128], index: 8, kind: input, shape index: {}]
  %s9 = inlined_call_operand.vmem [shape: bf16[2,128,128], index: 9, kind: output, shape index: {}]
  %s10 = sld [smem:[#allocation0]]
  $region81: #{ginp_forward.1} parent=0
    _
  %s12 = ssub.s32 1, %s10
  %s13 = scalar_select 0, %s12, %s10
  loop: start=0, step=1, limit=8
  $region2: #{ginp_forward.1} parent=0 // loop_pre_header
    _
  $region3: #{ginp_forward.1} parent=0 // loop_header
    %s15 = sphi 0, %s19
    %p16 = scmp.ge.s32.totalorder %s15, 8
    %s22 = sphi 0, %s34
    %s23 = sphi 0, %s30
    %s24 = sphi 0, %s22
    %s25 = sphi 0, %s23
    %s26 = sphi 0, %s24
    %s27 = sphi 0, %s25
    %s37 = sphi 0, %s39
    %s40 = sphi 0, %s37
    %s41 = sphi 0, %s40
    %s57 = sphi 0, %s41
    %s63 = sphi 0, %s65
    %s66 = sphi 0, %s63
    %s67 = sphi 0, %s66
    %s83 = sphi 0, %s67
    %s91 = sphi 0, %s93
    %s94 = sphi 0, %s91
    %s95 = sphi 0, %s94
    %s111 = sphi 0, %s95
    %s117 = sphi 0, %s119
    %s120 = sphi 0, %s117
    %s121 = sphi 0, %s120
    %s137 = sphi 0, %s121
    %s143 = sphi 0, %s145
    %s146 = sphi 0, %s143
    %s147 = sphi 0, %s146
    %s163 = sphi 0, %s147
    %s169 = sphi 0, %s171
    %s172 = sphi 0, %s169
    %s173 = sphi 0, %s172
    %s189 = sphi 0, %s173
    %s195 = sphi 0, %s197
    %s198 = sphi 0, %s195
    %s199 = sphi 0, %s198
    %s215 = sphi 0, %s199
    %s219 = sphi 0, %s219
    %s221 = sphi 0, %s219
    %s222 = sphi 0, %s221
    %s236 = sphi 0, %s222
    %s240 = sphi 0, %s240
    %s242 = sphi 0, %s240
    %s243 = sphi 0, %s242
    %s257 = sphi 0, %s243
    %s263 = sphi 0, %s265
    %s266 = sphi 0, %s263
    %s267 = sphi 0, %s266
    %s283 = sphi 0, %s267
  $region4: #{ginp_forward.1} parent=0 // loop_header_branch
    %18 = sbr.rel (%p16) target = $region8
  $region5: #{ginp_forward.1} parent=0 // loop_body
    %s20 = ssub.s32 %s15, 1
    %s21 = ssub.s32 %s15, 2
    %s28 = sadd.s32 1, %s23
    %p29 = scmp.ge.s32.totalorder %s28, 3
    %s30 = scalar_select %p29, 0, %s28
    %s31 = sadd.s32 1, %s22
    %s32 = scalar_select %p29, %s31, %s22
    %p33 = scmp.ge.s32.totalorder %s32, 2
    %s34 = scalar_select %p33, 0, %s32
    %s35 = ssub.s32 %s22, %s34
    %p36 = scmp.eq.s32.totalorder %s35, 0
    %s38 = sadd.s32 %s37, 1
    %s39 = scalar_select %p36, %s37, %s38
    %p42 = pneg %p36
    %p43 = scmp.eq.s32.totalorder %s15, 5
    %p44 = por %p42, %p43
    %p45 = scmp.ne.s32.totalorder %s37, %s40
    %p46 = scmp.eq.s32.totalorder %s15, 0
    %p47 = por %p45, %p46
    %p48 = scmp.ne.s32.totalorder %s37, %s40
    %p49 = scmp.eq.s32.totalorder %s20, 5
    %p50 = por %p48, %p49
    %p51 = scmp.ne.s32.totalorder %s40, %s41
    %p52 = scmp.eq.s32.totalorder %s20, 0
    %p53 = por %p51, %p52
    %p54 = scmp.ne.s32.totalorder %s40, %s41
    %p55 = scmp.eq.s32.totalorder %s21, 5
    %p56 = por %p54, %p55
    %p58 = scmp.ne.s32.totalorder %s41, %s57
    %p59 = scmp.eq.s32.totalorder %s21, 0
    %p60 = por %p58, %p59
    %s61 = ssub.s32 %s22, %s34
    %p62 = scmp.eq.s32.totalorder %s61, 0
    %s64 = sadd.s32 %s63, 1
    %s65 = scalar_select %p62, %s63, %s64
    %p68 = pneg %p62
    %p69 = scmp.eq.s32.totalorder %s15, 5
    %p70 = por %p68, %p69
    %p71 = scmp.ne.s32.totalorder %s63, %s66
    %p72 = scmp.eq.s32.totalorder %s15, 0
    %p73 = por %p71, %p72
    %p74 = scmp.ne.s32.totalorder %s63, %s66
    %p75 = scmp.eq.s32.totalorder %s20, 5
    %p76 = por %p74, %p75
    %p77 = scmp.ne.s32.totalorder %s66, %s67
    %p78 = scmp.eq.s32.totalorder %s20, 0
    %p79 = por %p77, %p78
    %p80 = scmp.ne.s32.totalorder %s66, %s67
    %p81 = scmp.eq.s32.totalorder %s21, 5
    %p82 = por %p80, %p81
    %p84 = scmp.ne.s32.totalorder %s67, %s83
    %p85 = scmp.eq.s32.totalorder %s21, 0
    %p86 = por %p84, %p85
    %s87 = ssub.s32 %s23, %s30
    %s88 = ssub.s32 %s22, %s34
    %s89 = sor.u32 %s87, %s88
    %p90 = scmp.eq.s32.totalorder %s89, 0
    %s92 = sadd.s32 %s91, 1
    %s93 = scalar_select %p90, %s91, %s92
    %p96 = pneg %p90
    %p97 = scmp.eq.s32.totalorder %s15, 5
    %p98 = por %p96, %p97
    %p99 = scmp.ne.s32.totalorder %s91, %s94
    %p100 = scmp.eq.s32.totalorder %s15, 0
    %p101 = por %p99, %p100
    %p102 = scmp.ne.s32.totalorder %s91, %s94
    %p103 = scmp.eq.s32.totalorder %s20, 5
    %p104 = por %p102, %p103
    %p105 = scmp.ne.s32.totalorder %s94, %s95
    %p106 = scmp.eq.s32.totalorder %s20, 0
    %p107 = por %p105, %p106
    %p108 = scmp.ne.s32.totalorder %s94, %s95
    %p109 = scmp.eq.s32.totalorder %s21, 5
    %p110 = por %p108, %p109
    %p112 = scmp.ne.s32.totalorder %s95, %s111
    %p113 = scmp.eq.s32.totalorder %s21, 0
    %p114 = por %p112, %p113
    %s115 = ssub.s32 %s23, %s30
    %p116 = scmp.eq.s32.totalorder %s115, 0
    %s118 = sadd.s32 %s117, 1
    %s119 = scalar_select %p116, %s117, %s118
    %p122 = pneg %p116
    %p123 = scmp.eq.s32.totalorder %s15, 5
    %p124 = por %p122, %p123
    %p125 = scmp.ne.s32.totalorder %s117, %s120
    %p126 = scmp.eq.s32.totalorder %s15, 0
    %p127 = por %p125, %p126
    %p128 = scmp.ne.s32.totalorder %s117, %s120
    %p129 = scmp.eq.s32.totalorder %s20, 5
    %p130 = por %p128, %p129
    %p131 = scmp.ne.s32.totalorder %s120, %s121
    %p132 = scmp.eq.s32.totalorder %s20, 0
    %p133 = por %p131, %p132
    %p134 = scmp.ne.s32.totalorder %s120, %s121
    %p135 = scmp.eq.s32.totalorder %s21, 5
    %p136 = por %p134, %p135
    %p138 = scmp.ne.s32.totalorder %s121, %s137
    %p139 = scmp.eq.s32.totalorder %s21, 0
    %p140 = por %p138, %p139
    %s141 = ssub.s32 %s23, %s30
    %p142 = scmp.eq.s32.totalorder %s141, 0
    %s144 = sadd.s32 %s143, 1
    %s145 = scalar_select %p142, %s143, %s144
    %p148 = pneg %p142
    %p149 = scmp.eq.s32.totalorder %s15, 5
    %p150 = por %p148, %p149
    %p151 = scmp.ne.s32.totalorder %s143, %s146
    %p152 = scmp.eq.s32.totalorder %s15, 0
    %p153 = por %p151, %p152
    %p154 = scmp.ne.s32.totalorder %s143, %s146
    %p155 = scmp.eq.s32.totalorder %s20, 5
    %p156 = por %p154, %p155
    %p157 = scmp.ne.s32.totalorder %s146, %s147
    %p158 = scmp.eq.s32.totalorder %s20, 0
    %p159 = por %p157, %p158
    %p160 = scmp.ne.s32.totalorder %s146, %s147
    %p161 = scmp.eq.s32.totalorder %s21, 5
    %p162 = por %p160, %p161
    %p164 = scmp.ne.s32.totalorder %s147, %s163
    %p165 = scmp.eq.s32.totalorder %s21, 0
    %p166 = por %p164, %p165
    %s167 = ssub.s32 %s23, %s30
    %p168 = scmp.eq.s32.totalorder %s167, 0
    %s170 = sadd.s32 %s169, 1
    %s171 = scalar_select %p168, %s169, %s170
    %p174 = pneg %p168
    %p175 = scmp.eq.s32.totalorder %s15, 5
    %p176 = por %p174, %p175
    %p177 = scmp.ne.s32.totalorder %s169, %s172
    %p178 = scmp.eq.s32.totalorder %s15, 0
    %p179 = por %p177, %p178
    %p180 = scmp.ne.s32.totalorder %s169, %s172
    %p181 = scmp.eq.s32.totalorder %s20, 5
    %p182 = por %p180, %p181
    %p183 = scmp.ne.s32.totalorder %s172, %s173
    %p184 = scmp.eq.s32.totalorder %s20, 0
    %p185 = por %p183, %p184
    %p186 = scmp.ne.s32.totalorder %s172, %s173
    %p187 = scmp.eq.s32.totalorder %s21, 5
    %p188 = por %p186, %p187
    %p190 = scmp.ne.s32.totalorder %s173, %s189
    %p191 = scmp.eq.s32.totalorder %s21, 0
    %p192 = por %p190, %p191
    %s193 = ssub.s32 %s23, %s30
    %p194 = scmp.eq.s32.totalorder %s193, 0
    %s196 = sadd.s32 %s195, 1
    %s197 = scalar_select %p194, %s195, %s196
    %p200 = pneg %p194
    %p201 = scmp.eq.s32.totalorder %s15, 5
    %p202 = por %p200, %p201
    %p203 = scmp.ne.s32.totalorder %s195, %s198
    %p204 = scmp.eq.s32.totalorder %s15, 0
    %p205 = por %p203, %p204
    %p206 = scmp.ne.s32.totalorder %s195, %s198
    %p207 = scmp.eq.s32.totalorder %s20, 5
    %p208 = por %p206, %p207
    %p209 = scmp.ne.s32.totalorder %s198, %s199
    %p210 = scmp.eq.s32.totalorder %s20, 0
    %p211 = por %p209, %p210
    %p212 = scmp.ne.s32.totalorder %s198, %s199
    %p213 = scmp.eq.s32.totalorder %s21, 5
    %p214 = por %p212, %p213
    %p216 = scmp.ne.s32.totalorder %s199, %s215
    %p217 = scmp.eq.s32.totalorder %s21, 0
    %p218 = por %p216, %p217
    %s220 = sadd.s32 %s219, 1
    %p223 = scmp.eq.s32.totalorder %s15, 5
    %p224 = scmp.ne.s32.totalorder %s219, %s221
    %p225 = scmp.eq.s32.totalorder %s15, 0
    %p226 = por %p224, %p225
    %p227 = scmp.ne.s32.totalorder %s219, %s221
    %p228 = scmp.eq.s32.totalorder %s20, 5
    %p229 = por %p227, %p228
    %p230 = scmp.ne.s32.totalorder %s221, %s222
    %p231 = scmp.eq.s32.totalorder %s20, 0
    %p232 = por %p230, %p231
    %p233 = scmp.ne.s32.totalorder %s221, %s222
    %p234 = scmp.eq.s32.totalorder %s21, 5
    %p235 = por %p233, %p234
    %p237 = scmp.ne.s32.totalorder %s222, %s236
    %p238 = scmp.eq.s32.totalorder %s21, 0
    %p239 = por %p237, %p238
    %s241 = sadd.s32 %s240, 1
    %p244 = scmp.eq.s32.totalorder %s15, 5
    %p245 = scmp.ne.s32.totalorder %s240, %s242
    %p246 = scmp.eq.s32.totalorder %s15, 0
    %p247 = por %p245, %p246
    %p248 = scmp.ne.s32.totalorder %s240, %s242
    %p249 = scmp.eq.s32.totalorder %s20, 5
    %p250 = por %p248, %p249
    %p251 = scmp.ne.s32.totalorder %s242, %s243
    %p252 = scmp.eq.s32.totalorder %s20, 0
    %p253 = por %p251, %p252
    %p254 = scmp.ne.s32.totalorder %s242, %s243
    %p255 = scmp.eq.s32.totalorder %s21, 5
    %p256 = por %p254, %p255
    %p258 = scmp.ne.s32.totalorder %s243, %s257
    %p259 = scmp.eq.s32.totalorder %s21, 0
    %p260 = por %p258, %p259
    %s261 = ssub.s32 %s22, %s34
    %p262 = scmp.eq.s32.totalorder %s261, 0
    %s264 = sadd.s32 %s263, 1
    %s265 = scalar_select %p262, %s263, %s264
    %p268 = pneg %p262
    %p269 = scmp.eq.s32.totalorder %s15, 5
    %p270 = por %p268, %p269
    %p271 = scmp.ne.s32.totalorder %s263, %s266
    %p272 = scmp.eq.s32.totalorder %s15, 0
    %p273 = por %p271, %p272
    %p274 = scmp.ne.s32.totalorder %s263, %s266
    %p275 = scmp.eq.s32.totalorder %s20, 5
    %p276 = por %p274, %p275
    %p277 = scmp.ne.s32.totalorder %s266, %s267
    %p278 = scmp.eq.s32.totalorder %s20, 0
    %p279 = por %p277, %p278
    %p280 = scmp.ne.s32.totalorder %s266, %s267
    %p281 = scmp.eq.s32.totalorder %s21, 5
    %p282 = por %p280, %p281
    %p284 = scmp.ne.s32.totalorder %s267, %s283
    %p285 = scmp.eq.s32.totalorder %s21, 0
    %p286 = por %p284, %p285
    %p287 = scmp.le.s32.totalorder 1, %s15
    %p288 = scmp.lt.s32.totalorder %s15, 7
    %p289 = pnand %p287, %p288
    %p290 = pneg %p289
    // Predicated region
    $region9: #{ginp_forward.1} parent=5 // pred_check
      _
    $region10: #{ginp_forward.1} parent=5 // pred_check_branch
      %292 = sbr.rel (%p289) target = $region12
    $region11: #{ginp_forward.1} parent=5 // pred_region
      %s293 = ssub.s32 %s15, 1
      // Predicated region
      $region13: #{ginp_forward.1} parent=11 // pred_check
        %p294 = pneg %p232
      $region14: #{ginp_forward.1} parent=11 // pred_check_branch
        %296 = sbr.rel (%p294) target = $region16
      $region15: #{ginp_forward.1} parent=11 // pred_region
        _
      $region16: #{ginp_forward.1} parent=11 // pred_fallthru
        _
      // Predicated region
      $region17: #{ginp_forward.1} parent=11 // pred_check
        %p297 = pneg %p253
      $region18: #{ginp_forward.1} parent=11 // pred_check_branch
        %299 = sbr.rel (%p297) target = $region20
      $region19: #{ginp_forward.1} parent=11 // pred_region
        _
      $region20: #{ginp_forward.1} parent=11 // pred_fallthru
        _
    $region12: #{ginp_forward.1} parent=5 // pred_fallthru
      _
    %p300 = scmp.lt.s32.totalorder %s15, 6
    // Predicated region
    $region21: #{ginp_forward.1} parent=5 // pred_check
      %p301 = pneg %p300
    $region22: #{ginp_forward.1} parent=5 // pred_check_branch
      %303 = sbr.rel (%p301) target = $region24
    $region23: #{ginp_forward.1} parent=5 // pred_region
      // Predicated region
      $region25: #{ginp_forward.1} parent=23 // pred_check
        %p304 = pneg %p47
      $region26: #{ginp_forward.1} parent=23 // pred_check_branch
        %306 = sbr.rel (%p304) target = $region28
      $region27: #{ginp_forward.1} parent=23 // pred_region
        %p307 = scmp.lt.s32.totalorder %s22, 1
        %s308 = scalar_select %p307, %s22, 1
        %s309 = smul.addr %s308, 16
        %s310 = smul.addr %s309, 4
        %s311 = scalar_lea.vmem %s0, %s310
      $region28: #{ginp_forward.1} parent=23 // pred_fallthru
        _
      // Predicated region
      $region29: #{ginp_forward.1} parent=23 // pred_check
        %p312 = pneg %p73
      $region30: #{ginp_forward.1} parent=23 // pred_check_branch
        %314 = sbr.rel (%p312) target = $region32
      $region31: #{ginp_forward.1} parent=23 // pred_region
        %p315 = scmp.lt.s32.totalorder %s22, 1
        %s316 = scalar_select %p315, %s22, 1
        %s317 = smul.addr %s316, 16
        %s318 = smul.addr %s317, 4
        %s319 = scalar_lea.vmem %s1, %s318
      $region32: #{ginp_forward.1} parent=23 // pred_fallthru
        _
      // Predicated region
      $region33: #{ginp_forward.1} parent=23 // pred_check
        %p320 = pneg %p101
      $region34: #{ginp_forward.1} parent=23 // pred_check_branch
        %322 = sbr.rel (%p320) target = $region36
      $region35: #{ginp_forward.1} parent=23 // pred_region
        %p323 = scmp.lt.s32.totalorder %s23, 2
        %s324 = scalar_select %p323, %s23, 2
        %p325 = scmp.lt.s32.totalorder %s22, 1
        %s326 = scalar_select %p325, %s22, 1
        %s327 = smul.addr %s326, 16
        %s328 = smul.addr %s324, 32
        %s329 = sadd.s32 %s327, %s328
        %s330 = smul.addr %s329, 4
        %s331 = scalar_lea.vmem %s2, %s330
      $region36: #{ginp_forward.1} parent=23 // pred_fallthru
        _
      // Predicated region
      $region37: #{ginp_forward.1} parent=23 // pred_check
        %p332 = pneg %p127
      $region38: #{ginp_forward.1} parent=23 // pred_check_branch
        %334 = sbr.rel (%p332) target = $region40
      $region39: #{ginp_forward.1} parent=23 // pred_region
        %p335 = scmp.lt.s32.totalorder %s23, 2
        %s336 = scalar_select %p335, %s23, 2
        %s337 = smul.addr %s336, 16
        %s338 = smul.addr %s337, 4
        %s339 = scalar_lea.vmem %s3, %s338
      $region40: #{ginp_forward.1} parent=23 // pred_fallthru
        _
      // Predicated region
      $region41: #{ginp_forward.1} parent=23 // pred_check
        %p340 = pneg %p153
      $region42: #{ginp_forward.1} parent=23 // pred_check_branch
        %342 = sbr.rel (%p340) target = $region44
      $region43: #{ginp_forward.1} parent=23 // pred_region
        %p343 = scmp.lt.s32.totalorder %s23, 2
        %s344 = scalar_select %p343, %s23, 2
        %s345 = scalar_lea.vmem %s4, %s344
      $region44: #{ginp_forward.1} parent=23 // pred_fallthru
        _
      // Predicated region
      $region45: #{ginp_forward.1} parent=23 // pred_check
        %p346 = pneg %p179
      $region46: #{ginp_forward.1} parent=23 // pred_check_branch
        %348 = sbr.rel (%p346) target = $region48
      $region47: #{ginp_forward.1} parent=23 // pred_region
        %p349 = scmp.lt.s32.totalorder %s23, 2
        %s350 = scalar_select %p349, %s23, 2
        %s351 = smul.addr %s350, 16
        %s352 = smul.addr %s351, 4
        %s353 = scalar_lea.vmem %s5, %s352
      $region48: #{ginp_forward.1} parent=23 // pred_fallthru
        _
      // Predicated region
      $region49: #{ginp_forward.1} parent=23 // pred_check
        %p354 = pneg %p205
      $region50: #{ginp_forward.1} parent=23 // pred_check_branch
        %356 = sbr.rel (%p354) target = $region52
      $region51: #{ginp_forward.1} parent=23 // pred_region
        %p357 = scmp.lt.s32.totalorder %s23, 2
        %s358 = scalar_select %p357, %s23, 2
        %s359 = scalar_lea.vmem %s6, %s358
      $region52: #{ginp_forward.1} parent=23 // pred_fallthru
        _
    $region24: #{ginp_forward.1} parent=5 // pred_fallthru
      _
    %p360 = scmp.le.s32.totalorder 1, %s15
    %p361 = scmp.lt.s32.totalorder %s15, 7
    %p362 = pnand %p360, %p361
    %p363 = pneg %p362
    // Predicated region
    $region53: #{ginp_forward.1} parent=5 // pred_check
      _
    $region54: #{ginp_forward.1} parent=5 // pred_check_branch
      %365 = sbr.rel (%p362) target = $region56
    $region55: #{ginp_forward.1} parent=5 // pred_region
      %s366 = ssub.s32 %s15, 1
      %p367 = scmp.lt.s32.totalorder %s24, 1
      %s368 = scalar_select %p367, %s24, 1
      %s369 = smul.addr %s368, 16
      %s370 = smul.addr %s369, 4
      %s371 = scalar_lea.vmem %s0, %s370
      %p372 = pneg %p53
      %p373 = pneg %p50
      %p374 = scmp.lt.s32.totalorder %s24, 1
      %s375 = scalar_select %p374, %s24, 1
      %s376 = smul.addr %s375, 16
      %s377 = smul.addr %s376, 4
      %s378 = scalar_lea.vmem %s1, %s377
      %p379 = pneg %p79
      %p380 = pneg %p76
      %p381 = scmp.lt.s32.totalorder %s25, 2
      %s382 = scalar_select %p381, %s25, 2
      %p383 = scmp.lt.s32.totalorder %s24, 1
      %s384 = scalar_select %p383, %s24, 1
      %s385 = smul.addr %s384, 16
      %s386 = smul.addr %s382, 32
      %s387 = sadd.s32 %s385, %s386
      %s388 = smul.addr %s387, 4
      %s389 = scalar_lea.vmem %s2, %s388
      %p390 = pneg %p107
      %p391 = pneg %p104
      %p392 = scmp.lt.s32.totalorder %s25, 2
      %s393 = scalar_select %p392, %s25, 2
      %s394 = smul.addr %s393, 16
      %s395 = smul.addr %s394, 4
      %s396 = scalar_lea.vmem %s3, %s395
      %p397 = pneg %p133
      %p398 = pneg %p130
      %p399 = scmp.lt.s32.totalorder %s25, 2
      %s400 = scalar_select %p399, %s25, 2
      %s401 = scalar_lea.vmem %s4, %s400
      %p402 = pneg %p159
      %p403 = pneg %p156
      %p404 = scmp.lt.s32.totalorder %s25, 2
      %s405 = scalar_select %p404, %s25, 2
      %s406 = smul.addr %s405, 16
      %s407 = smul.addr %s406, 4
      %s408 = scalar_lea.vmem %s5, %s407
      %p409 = pneg %p185
      %p410 = pneg %p182
      %p411 = scmp.lt.s32.totalorder %s25, 2
      %s412 = scalar_select %p411, %s25, 2
      %s413 = scalar_lea.vmem %s6, %s412
      %p414 = pneg %p211
      %p415 = pneg %p208
      %p416 = pneg %p232
      %p417 = pneg %p229
      %p418 = pneg %p253
      %p419 = pneg %p250
      %p420 = pneg %p279
      %p421 = pneg %p276
      %p422 = scmp.lt.s32.totalorder %s24, 1
      %s423 = scalar_select %p422, %s24, 1
      %s424 = smul.addr %s423, 16
      %s425 = smul.addr %s424, 4
      %s426 = scalar_lea.vmem %s9, %s425
      %p427 = scmp.lt.s32.totalorder %s24, 1
      %s428 = scalar_select %p427, %s24, 1
      %s429 = smul.addr %s428, 16
      %s430 = smul.addr %s429, 4
      %s431 = scalar_lea.vmem %s0, %s430
      %p432 = scmp.lt.s32.totalorder %s24, 1
      %s433 = scalar_select %p432, %s24, 1
      %s434 = smul.addr %s433, 16
      %s435 = smul.addr %s434, 4
      %s436 = scalar_lea.vmem %s1, %s435
      %p437 = scmp.lt.s32.totalorder %s25, 2
      %s438 = scalar_select %p437, %s25, 2
      %p439 = scmp.lt.s32.totalorder %s24, 1
      %s440 = scalar_select %p439, %s24, 1
      %s441 = smul.addr %s440, 16
      %s442 = smul.addr %s438, 32
      %s443 = sadd.s32 %s441, %s442
      %s444 = smul.addr %s443, 4
      %s445 = scalar_lea.vmem %s2, %s444
      %p446 = scmp.lt.s32.totalorder %s25, 2
      %s447 = scalar_select %p446, %s25, 2
      %s448 = smul.addr %s447, 16
      %s449 = smul.addr %s448, 4
      %s450 = scalar_lea.vmem %s3, %s449
      %p451 = scmp.lt.s32.totalorder %s25, 2
      %s452 = scalar_select %p451, %s25, 2
      %s453 = scalar_lea.vmem %s4, %s452
      %p454 = scmp.lt.s32.totalorder %s25, 2
      %s455 = scalar_select %p454, %s25, 2
      %s456 = smul.addr %s455, 16
      %s457 = smul.addr %s456, 4
      %s458 = scalar_lea.vmem %s5, %s457
      %p459 = scmp.lt.s32.totalorder %s25, 2
      %s460 = scalar_select %p459, %s25, 2
      %s461 = scalar_lea.vmem %s6, %s460
      %p462 = scmp.lt.s32.totalorder %s24, 1
      %s463 = scalar_select %p462, %s24, 1
      %s464 = smul.addr %s463, 16
      %s465 = smul.addr %s464, 4
      %s466 = scalar_lea.vmem %s9, %s465
      %p467 = scmp.eq.s32.totalorder %s25, 0
      // Predicated region
      $region57: #{ginp_forward.1} parent=55 // pred_check
        %p468 = pneg %p467
      $region58: #{ginp_forward.1} parent=55 // pred_check_branch
        %470 = sbr.rel (%p468) target = $region60
      $region59: #{ginp_forward.1} parent=55 // pred_region
        %v471 = vld [vmem:[%s436] sm:$0xf]
        %v472 = vld [vmem:[%s436 + $0x4] sm:$0xf]
        %v473 = vld [vmem:[%s436 + $0x8] sm:$0xf]
        %v474 = vld [vmem:[%s436 + $0xc] sm:$0xf]
        %v475 = vld [vmem:[%s436 + $0x10] sm:$0xf]
        %v476 = vld [vmem:[%s436 + $0x14] sm:$0xf]
        %v477 = vld [vmem:[%s436 + $0x18] sm:$0xf]
        %v478 = vld [vmem:[%s436 + $0x1c] sm:$0xf]
        %v479 = vld [vmem:[%s436 + $0x20] sm:$0xf]
        %v480 = vld [vmem:[%s436 + $0x24] sm:$0xf]
        %v481 = vld [vmem:[%s436 + $0x28] sm:$0xf]
        %v482 = vld [vmem:[%s436 + $0x2c] sm:$0xf]
        %v483 = vld [vmem:[%s436 + $0x30] sm:$0xf]
        %v484 = vld [vmem:[%s436 + $0x34] sm:$0xf]
        %v485 = vld [vmem:[%s436 + $0x38] sm:$0xf]
        %v486 = vld [vmem:[%s436 + $0x3c] sm:$0xf]
        %487 = vst [vmem:[#allocation2] sm:$0xf] %v471
        %488 = vst [vmem:[#allocation2 + $0x4] sm:$0xf] %v472
        %489 = vst [vmem:[#allocation2 + $0x8] sm:$0xf] %v473
        %490 = vst [vmem:[#allocation2 + $0xc] sm:$0xf] %v474
        %491 = vst [vmem:[#allocation2 + $0x10] sm:$0xf] %v475
        %492 = vst [vmem:[#allocation2 + $0x14] sm:$0xf] %v476
        %493 = vst [vmem:[#allocation2 + $0x18] sm:$0xf] %v477
        %494 = vst [vmem:[#allocation2 + $0x1c] sm:$0xf] %v478
        %495 = vst [vmem:[#allocation2 + $0x20] sm:$0xf] %v479
        %496 = vst [vmem:[#allocation2 + $0x24] sm:$0xf] %v480
        %497 = vst [vmem:[#allocation2 + $0x28] sm:$0xf] %v481
        %498 = vst [vmem:[#allocation2 + $0x2c] sm:$0xf] %v482
        %499 = vst [vmem:[#allocation2 + $0x30] sm:$0xf] %v483
        %500 = vst [vmem:[#allocation2 + $0x34] sm:$0xf] %v484
        %501 = vst [vmem:[#allocation2 + $0x38] sm:$0xf] %v485
        %502 = vst [vmem:[#allocation2 + $0x3c] sm:$0xf] %v486
      $region60: #{ginp_forward.1} parent=55 // pred_fallthru
        _
      %v503 = vld [vmem:[#allocation2] sm:$0xf]
      %v504 = vld [vmem:[#allocation2 + $0x4] sm:$0xf]
      %v505 = vld [vmem:[#allocation2 + $0x8] sm:$0xf]
      %v506 = vld [vmem:[#allocation2 + $0xc] sm:$0xf]
      %v507 = vld [vmem:[#allocation2 + $0x10] sm:$0xf]
      %v508 = vld [vmem:[#allocation2 + $0x14] sm:$0xf]
      %v509 = vld [vmem:[#allocation2 + $0x18] sm:$0xf]
      %v510 = vld [vmem:[#allocation2 + $0x1c] sm:$0xf]
      %v511 = vld [vmem:[#allocation2 + $0x20] sm:$0xf]
      %v512 = vld [vmem:[#allocation2 + $0x24] sm:$0xf]
      %v513 = vld [vmem:[#allocation2 + $0x28] sm:$0xf]
      %v514 = vld [vmem:[#allocation2 + $0x2c] sm:$0xf]
      %v515 = vld [vmem:[#allocation2 + $0x30] sm:$0xf]
      %v516 = vld [vmem:[#allocation2 + $0x34] sm:$0xf]
      %v517 = vld [vmem:[#allocation2 + $0x38] sm:$0xf]
      %v518 = vld [vmem:[#allocation2 + $0x3c] sm:$0xf]
      %v519 = vld [vmem:[%s431] sm:$0xf]
      %v520 = vld [vmem:[%s431 + $0x4] sm:$0xf]
      %v521 = vld [vmem:[%s431 + $0x8] sm:$0xf]
      %v522 = vld [vmem:[%s431 + $0xc] sm:$0xf]
      %v523 = vld [vmem:[%s431 + $0x10] sm:$0xf]
      %v524 = vld [vmem:[%s431 + $0x14] sm:$0xf]
      %v525 = vld [vmem:[%s431 + $0x18] sm:$0xf]
      %v526 = vld [vmem:[%s431 + $0x1c] sm:$0xf]
      %v527 = vld [vmem:[%s431 + $0x20] sm:$0xf]
      %v528 = vld [vmem:[%s431 + $0x24] sm:$0xf]
      %v529 = vld [vmem:[%s431 + $0x28] sm:$0xf]
      %v530 = vld [vmem:[%s431 + $0x2c] sm:$0xf]
      %v531 = vld [vmem:[%s431 + $0x30] sm:$0xf]
      %v532 = vld [vmem:[%s431 + $0x34] sm:$0xf]
      %v533 = vld [vmem:[%s431 + $0x38] sm:$0xf]
      %v534 = vld [vmem:[%s431 + $0x3c] sm:$0xf]
      %v535 = vld [vmem:[%s445] sm:$0xf]
      %v536 = vld [vmem:[%s445 + $0x4] sm:$0xf]
      %v537 = vld [vmem:[%s445 + $0x8] sm:$0xf]
      %v538 = vld [vmem:[%s445 + $0xc] sm:$0xf]
      %v539 = vld [vmem:[%s445 + $0x10] sm:$0xf]
      %v540 = vld [vmem:[%s445 + $0x14] sm:$0xf]
      %v541 = vld [vmem:[%s445 + $0x18] sm:$0xf]
      %v542 = vld [vmem:[%s445 + $0x1c] sm:$0xf]
      %v543 = vld [vmem:[%s445 + $0x20] sm:$0xf]
      %v544 = vld [vmem:[%s445 + $0x24] sm:$0xf]
      %v545 = vld [vmem:[%s445 + $0x28] sm:$0xf]
      %v546 = vld [vmem:[%s445 + $0x2c] sm:$0xf]
      %v547 = vld [vmem:[%s445 + $0x30] sm:$0xf]
      %v548 = vld [vmem:[%s445 + $0x34] sm:$0xf]
      %v549 = vld [vmem:[%s445 + $0x38] sm:$0xf]
      %v550 = vld [vmem:[%s445 + $0x3c] sm:$0xf]
      %v551 = vunpack.c.l.bf16 %v535
      %v552 = vunpack.c.l.bf16 %v536
      %v553 = vunpack.c.l.bf16 %v537
      %v554 = vunpack.c.l.bf16 %v538
      %v555 = vunpack.c.l.bf16 %v539
      %v556 = vunpack.c.l.bf16 %v540
      %v557 = vunpack.c.l.bf16 %v541
      %v558 = vunpack.c.l.bf16 %v542
      %v559 = vunpack.c.l.bf16 %v543
      %v560 = vunpack.c.l.bf16 %v544
      %v561 = vunpack.c.l.bf16 %v545
      %v562 = vunpack.c.l.bf16 %v546
      %v563 = vunpack.c.l.bf16 %v547
      %v564 = vunpack.c.l.bf16 %v548
      %v565 = vunpack.c.l.bf16 %v549
      %v566 = vunpack.c.l.bf16 %v550
      %v583 = vunpack.c.l.b16 %v519
      %v584 = vunpack.c.l.b16 %v520
      %v585 = vunpack.c.l.b16 %v521
      %v586 = vunpack.c.l.b16 %v522
      %v587 = vunpack.c.l.b16 %v523
      %v588 = vunpack.c.l.b16 %v524
      %v589 = vunpack.c.l.b16 %v525
      %v590 = vunpack.c.l.b16 %v526
      %v591 = vunpack.c.l.b16 %v527
      %v592 = vunpack.c.l.b16 %v528
      %v593 = vunpack.c.l.b16 %v529
      %v594 = vunpack.c.l.b16 %v530
      %v595 = vunpack.c.l.b16 %v531
      %v596 = vunpack.c.l.b16 %v532
      %v597 = vunpack.c.l.b16 %v533
      %v598 = vunpack.c.l.b16 %v534
      %v599 = vpack.c.b16 %v584, %v583
      %v600 = vpack.c.b16 %v586, %v585
      %v601 = vpack.c.b16 %v588, %v587
      %v602 = vpack.c.b16 %v590, %v589
      %v603 = vpack.c.b16 %v592, %v591
      %v604 = vpack.c.b16 %v594, %v593
      %v605 = vpack.c.b16 %v596, %v595
      %v606 = vpack.c.b16 %v598, %v597
      %v631 = vunpack.c.l.b16 %v503
      %v632 = vunpack.c.l.b16 %v504
      %v633 = vunpack.c.l.b16 %v505
      %v634 = vunpack.c.l.b16 %v506
      %v635 = vunpack.c.l.b16 %v507
      %v636 = vunpack.c.l.b16 %v508
      %v637 = vunpack.c.l.b16 %v509
      %v638 = vunpack.c.l.b16 %v510
      %v639 = vunpack.c.l.b16 %v511
      %v640 = vunpack.c.l.b16 %v512
      %v641 = vunpack.c.l.b16 %v513
      %v642 = vunpack.c.l.b16 %v514
      %v643 = vunpack.c.l.b16 %v515
      %v644 = vunpack.c.l.b16 %v516
      %v645 = vunpack.c.l.b16 %v517
      %v646 = vunpack.c.l.b16 %v518
      %v647 = vpack.c.b16 %v632, %v631
      %v648 = vpack.c.b16 %v634, %v633
      %v649 = vpack.c.b16 %v636, %v635
      %v650 = vpack.c.b16 %v638, %v637
      %v651 = vpack.c.b16 %v640, %v639
      %v652 = vpack.c.b16 %v642, %v641
      %v653 = vpack.c.b16 %v644, %v643
      %v654 = vpack.c.b16 %v646, %v645
      %663 = vmatpush.bf16.msra.mxu0 %v654
      %664 = vmatpush.bf16.msra.mxu0 %v653
      %665 = vmatpush.bf16.msra.mxu0 %v652
      %666 = vmatpush.bf16.msra.mxu0 %v651
      %667 = vmatpush.bf16.msra.mxu0 %v650
      %668 = vmatpush.bf16.msra.mxu0 %v649
      %669 = vmatpush.bf16.msra.mxu0 %v648
      %670 = vmatpush.bf16.msra.mxu0 %v647
      %671 = vmatmul.bf16.gmra.mxu0 %v599
      %v672 = vpop.f32.mrf.mxu0
      %v673 = vadd.f32 %v551, %v672
      %v674 = vpop.f32.mrf.mxu0
      %v675 = vadd.f32 %v552, %v674
      %676 = vmatmul.bf16.gmra.mxu0 %v600
      %v677 = vpop.f32.mrf.mxu0
      %v678 = vadd.f32 %v553, %v677
      %v679 = vpop.f32.mrf.mxu0
      %v680 = vadd.f32 %v554, %v679
      %681 = vmatmul.bf16.gmra.mxu0 %v601
      %v682 = vpop.f32.mrf.mxu0
      %v683 = vadd.f32 %v555, %v682
      %v684 = vpop.f32.mrf.mxu0
      %v685 = vadd.f32 %v556, %v684
      %686 = vmatmul.bf16.gmra.mxu0 %v602
      %v687 = vpop.f32.mrf.mxu0
      %v688 = vadd.f32 %v557, %v687
      %v689 = vpop.f32.mrf.mxu0
      %v690 = vadd.f32 %v558, %v689
      %691 = vmatmul.bf16.gmra.mxu0 %v603
      %v692 = vpop.f32.mrf.mxu0
      %v693 = vadd.f32 %v559, %v692
      %v694 = vpop.f32.mrf.mxu0
      %v695 = vadd.f32 %v560, %v694
      %696 = vmatmul.bf16.gmra.mxu0 %v604
      %v697 = vpop.f32.mrf.mxu0
      %v698 = vadd.f32 %v561, %v697
      %v699 = vpop.f32.mrf.mxu0
      %v700 = vadd.f32 %v562, %v699
      %701 = vmatmul.bf16.gmra.mxu0 %v605
      %v702 = vpop.f32.mrf.mxu0
      %v703 = vadd.f32 %v563, %v702
      %v704 = vpop.f32.mrf.mxu0
      %v705 = vadd.f32 %v564, %v704
      %706 = vmatmul.bf16.gmra.mxu0 %v606
      %v707 = vpop.f32.mrf.mxu0
      %v708 = vadd.f32 %v565, %v707
      %v709 = vpop.f32.mrf.mxu0
      %v710 = vadd.f32 %v566, %v709
      %711 = vdwg.mxu0
      %v712 = vpack.c.bf16 %v675, %v673
      %v713 = vpack.c.bf16 %v680, %v678
      %v714 = vpack.c.bf16 %v685, %v683
      %v715 = vpack.c.bf16 %v690, %v688
      %v716 = vpack.c.bf16 %v695, %v693
      %v717 = vpack.c.bf16 %v700, %v698
      %v718 = vpack.c.bf16 %v705, %v703
      %v719 = vpack.c.bf16 %v710, %v708
      %v720 = vld [vmem:[%s450] sm:$0xf]
      %v721 = vld [vmem:[%s450 + $0x4] sm:$0xf]
      %v722 = vld [vmem:[%s450 + $0x8] sm:$0xf]
      %v723 = vld [vmem:[%s450 + $0xc] sm:$0xf]
      %v724 = vld [vmem:[%s450 + $0x10] sm:$0xf]
      %v725 = vld [vmem:[%s450 + $0x14] sm:$0xf]
      %v726 = vld [vmem:[%s450 + $0x18] sm:$0xf]
      %v727 = vld [vmem:[%s450 + $0x1c] sm:$0xf]
      %v728 = vld [vmem:[%s450 + $0x20] sm:$0xf]
      %v729 = vld [vmem:[%s450 + $0x24] sm:$0xf]
      %v730 = vld [vmem:[%s450 + $0x28] sm:$0xf]
      %v731 = vld [vmem:[%s450 + $0x2c] sm:$0xf]
      %v732 = vld [vmem:[%s450 + $0x30] sm:$0xf]
      %v733 = vld [vmem:[%s450 + $0x34] sm:$0xf]
      %v734 = vld [vmem:[%s450 + $0x38] sm:$0xf]
      %v735 = vld [vmem:[%s450 + $0x3c] sm:$0xf]
      %v736 = vld [vmem:[%s453] sm:$0x1]
      %v738 = vperm.slane %v736, 0
      %v756 = vunpack.c.l.b16 %v720
      %v757 = vunpack.c.l.b16 %v721
      %v758 = vunpack.c.l.b16 %v722
      %v759 = vunpack.c.l.b16 %v723
      %v760 = vunpack.c.l.b16 %v724
      %v761 = vunpack.c.l.b16 %v725
      %v762 = vunpack.c.l.b16 %v726
      %v763 = vunpack.c.l.b16 %v727
      %v764 = vunpack.c.l.b16 %v728
      %v765 = vunpack.c.l.b16 %v729
      %v766 = vunpack.c.l.b16 %v730
      %v767 = vunpack.c.l.b16 %v731
      %v768 = vunpack.c.l.b16 %v732
      %v769 = vunpack.c.l.b16 %v733
      %v770 = vunpack.c.l.b16 %v734
      %v771 = vunpack.c.l.b16 %v735
      %v772 = vpack.c.b16 %v757, %v756
      %v773 = vpack.c.b16 %v759, %v758
      %v774 = vpack.c.b16 %v761, %v760
      %v775 = vpack.c.b16 %v763, %v762
      %v776 = vpack.c.b16 %v765, %v764
      %v777 = vpack.c.b16 %v767, %v766
      %v778 = vpack.c.b16 %v769, %v768
      %v779 = vpack.c.b16 %v771, %v770
      %788 = vmatpush.bf16.msra.mxu0 %v779
      %789 = vmatpush.bf16.msra.mxu0 %v778
      %790 = vmatpush.bf16.msra.mxu0 %v777
      %791 = vmatpush.bf16.msra.mxu0 %v776
      %792 = vmatpush.bf16.msra.mxu0 %v775
      %793 = vmatpush.bf16.msra.mxu0 %v774
      %794 = vmatpush.bf16.msra.mxu0 %v773
      %795 = vmatpush.bf16.msra.mxu0 %v772
      %796 = vmatmul.bf16.gmra.mxu0 %v712
      %v797 = vpop.f32.mrf.mxu0
      %v798 = vadd.f32 %v738, %v797
      %v799 = vpop.f32.mrf.mxu0
      %v800 = vadd.f32 %v738, %v799
      %801 = vmatmul.bf16.gmra.mxu0 %v713
      %v802 = vpop.f32.mrf.mxu0
      %v803 = vadd.f32 %v738, %v802
      %v804 = vpop.f32.mrf.mxu0
      %v805 = vadd.f32 %v738, %v804
      %806 = vmatmul.bf16.gmra.mxu0 %v714
      %v807 = vpop.f32.mrf.mxu0
      %v808 = vadd.f32 %v738, %v807
      %v809 = vpop.f32.mrf.mxu0
      %v810 = vadd.f32 %v738, %v809
      %811 = vmatmul.bf16.gmra.mxu0 %v715
      %v812 = vpop.f32.mrf.mxu0
      %v813 = vadd.f32 %v738, %v812
      %v814 = vpop.f32.mrf.mxu0
      %v815 = vadd.f32 %v738, %v814
      %816 = vmatmul.bf16.gmra.mxu0 %v716
      %v817 = vpop.f32.mrf.mxu0
      %v818 = vadd.f32 %v738, %v817
      %v819 = vpop.f32.mrf.mxu0
      %v820 = vadd.f32 %v738, %v819
      %821 = vmatmul.bf16.gmra.mxu0 %v717
      %v822 = vpop.f32.mrf.mxu0
      %v823 = vadd.f32 %v738, %v822
      %v824 = vpop.f32.mrf.mxu0
      %v825 = vadd.f32 %v738, %v824
      %826 = vmatmul.bf16.gmra.mxu0 %v718
      %v827 = vpop.f32.mrf.mxu0
      %v828 = vadd.f32 %v738, %v827
      %v829 = vpop.f32.mrf.mxu0
      %v830 = vadd.f32 %v738, %v829
      %831 = vmatmul.bf16.gmra.mxu0 %v719
      %v832 = vpop.f32.mrf.mxu0
      %v833 = vadd.f32 %v738, %v832
      %v834 = vpop.f32.mrf.mxu0
      %v835 = vadd.f32 %v738, %v834
      %836 = vdwg.mxu0
      %v837 = vmax.f32 %v798, 0.0
      %v838 = vmax.f32 %v800, 0.0
      %v839 = vmax.f32 %v803, 0.0
      %v840 = vmax.f32 %v805, 0.0
      %v841 = vmax.f32 %v808, 0.0
      %v842 = vmax.f32 %v810, 0.0
      %v843 = vmax.f32 %v813, 0.0
      %v844 = vmax.f32 %v815, 0.0
      %v845 = vmax.f32 %v818, 0.0
      %v846 = vmax.f32 %v820, 0.0
      %v847 = vmax.f32 %v823, 0.0
      %v848 = vmax.f32 %v825, 0.0
      %v849 = vmax.f32 %v828, 0.0
      %v850 = vmax.f32 %v830, 0.0
      %v851 = vmax.f32 %v833, 0.0
      %v852 = vmax.f32 %v835, 0.0
      %v853 = vpack.c.bf16 %v838, %v837
      %v854 = vpack.c.bf16 %v840, %v839
      %v855 = vpack.c.bf16 %v842, %v841
      %v856 = vpack.c.bf16 %v844, %v843
      %v857 = vpack.c.bf16 %v846, %v845
      %v858 = vpack.c.bf16 %v848, %v847
      %v859 = vpack.c.bf16 %v850, %v849
      %v860 = vpack.c.bf16 %v852, %v851
      %v861 = vld [vmem:[%s458] sm:$0xf]
      %v862 = vld [vmem:[%s458 + $0x4] sm:$0xf]
      %v863 = vld [vmem:[%s458 + $0x8] sm:$0xf]
      %v864 = vld [vmem:[%s458 + $0xc] sm:$0xf]
      %v865 = vld [vmem:[%s458 + $0x10] sm:$0xf]
      %v866 = vld [vmem:[%s458 + $0x14] sm:$0xf]
      %v867 = vld [vmem:[%s458 + $0x18] sm:$0xf]
      %v868 = vld [vmem:[%s458 + $0x1c] sm:$0xf]
      %v869 = vld [vmem:[%s458 + $0x20] sm:$0xf]
      %v870 = vld [vmem:[%s458 + $0x24] sm:$0xf]
      %v871 = vld [vmem:[%s458 + $0x28] sm:$0xf]
      %v872 = vld [vmem:[%s458 + $0x2c] sm:$0xf]
      %v873 = vld [vmem:[%s458 + $0x30] sm:$0xf]
      %v874 = vld [vmem:[%s458 + $0x34] sm:$0xf]
      %v875 = vld [vmem:[%s458 + $0x38] sm:$0xf]
      %v876 = vld [vmem:[%s458 + $0x3c] sm:$0xf]
      %v877 = vld [vmem:[%s461] sm:$0x1]
      %v879 = vperm.slane %v877, 0
      %v897 = vunpack.c.l.b16 %v861
      %v898 = vunpack.c.l.b16 %v862
      %v899 = vunpack.c.l.b16 %v863
      %v900 = vunpack.c.l.b16 %v864
      %v901 = vunpack.c.l.b16 %v865
      %v902 = vunpack.c.l.b16 %v866
      %v903 = vunpack.c.l.b16 %v867
      %v904 = vunpack.c.l.b16 %v868
      %v905 = vunpack.c.l.b16 %v869
      %v906 = vunpack.c.l.b16 %v870
      %v907 = vunpack.c.l.b16 %v871
      %v908 = vunpack.c.l.b16 %v872
      %v909 = vunpack.c.l.b16 %v873
      %v910 = vunpack.c.l.b16 %v874
      %v911 = vunpack.c.l.b16 %v875
      %v912 = vunpack.c.l.b16 %v876
      %v913 = vpack.c.b16 %v898, %v897
      %v914 = vpack.c.b16 %v900, %v899
      %v915 = vpack.c.b16 %v902, %v901
      %v916 = vpack.c.b16 %v904, %v903
      %v917 = vpack.c.b16 %v906, %v905
      %v918 = vpack.c.b16 %v908, %v907
      %v919 = vpack.c.b16 %v910, %v909
      %v920 = vpack.c.b16 %v912, %v911
      %929 = vmatpush.bf16.msra.mxu0 %v920
      %930 = vmatpush.bf16.msra.mxu0 %v919
      %931 = vmatpush.bf16.msra.mxu0 %v918
      %932 = vmatpush.bf16.msra.mxu0 %v917
      %933 = vmatpush.bf16.msra.mxu0 %v916
      %934 = vmatpush.bf16.msra.mxu0 %v915
      %935 = vmatpush.bf16.msra.mxu0 %v914
      %936 = vmatpush.bf16.msra.mxu0 %v913
      %937 = vmatmul.bf16.gmra.mxu0 %v853
      %v938 = vpop.f32.mrf.mxu0
      %v939 = vadd.f32 %v879, %v938
      %v940 = vpop.f32.mrf.mxu0
      %v941 = vadd.f32 %v879, %v940
      %942 = vmatmul.bf16.gmra.mxu0 %v854
      %v943 = vpop.f32.mrf.mxu0
      %v944 = vadd.f32 %v879, %v943
      %v945 = vpop.f32.mrf.mxu0
      %v946 = vadd.f32 %v879, %v945
      %947 = vmatmul.bf16.gmra.mxu0 %v855
      %v948 = vpop.f32.mrf.mxu0
      %v949 = vadd.f32 %v879, %v948
      %v950 = vpop.f32.mrf.mxu0
      %v951 = vadd.f32 %v879, %v950
      %952 = vmatmul.bf16.gmra.mxu0 %v856
      %v953 = vpop.f32.mrf.mxu0
      %v954 = vadd.f32 %v879, %v953
      %v955 = vpop.f32.mrf.mxu0
      %v956 = vadd.f32 %v879, %v955
      %957 = vmatmul.bf16.gmra.mxu0 %v857
      %v958 = vpop.f32.mrf.mxu0
      %v959 = vadd.f32 %v879, %v958
      %v960 = vpop.f32.mrf.mxu0
      %v961 = vadd.f32 %v879, %v960
      %962 = vmatmul.bf16.gmra.mxu0 %v858
      %v963 = vpop.f32.mrf.mxu0
      %v964 = vadd.f32 %v879, %v963
      %v965 = vpop.f32.mrf.mxu0
      %v966 = vadd.f32 %v879, %v965
      %967 = vmatmul.bf16.gmra.mxu0 %v859
      %v968 = vpop.f32.mrf.mxu0
      %v969 = vadd.f32 %v879, %v968
      %v970 = vpop.f32.mrf.mxu0
      %v971 = vadd.f32 %v879, %v970
      %972 = vmatmul.bf16.gmra.mxu0 %v860
      %v973 = vpop.f32.mrf.mxu0
      %v974 = vadd.f32 %v879, %v973
      %v975 = vpop.f32.mrf.mxu0
      %v976 = vadd.f32 %v879, %v975
      %977 = vdwg.mxu0
      %p978 = scmp.eq.s32.totalorder %s25, 2
      %p979 = scmp.ne.s32.totalorder %s25, 2
      // Predicated region
      $region61: #{ginp_forward.1} parent=55 // pred_check
        %p980 = pneg %p979
      $region62: #{ginp_forward.1} parent=55 // pred_check_branch
        %982 = sbr.rel (%p980) target = $region64
      $region63: #{ginp_forward.1} parent=55 // pred_region
        %v983 = vmax.f32 %v939, 0.0
        %v984 = vmax.f32 %v941, 0.0
        %v985 = vmax.f32 %v944, 0.0
        %v986 = vmax.f32 %v946, 0.0
        %v987 = vmax.f32 %v949, 0.0
        %v988 = vmax.f32 %v951, 0.0
        %v989 = vmax.f32 %v954, 0.0
        %v990 = vmax.f32 %v956, 0.0
        %v991 = vmax.f32 %v959, 0.0
        %v992 = vmax.f32 %v961, 0.0
        %v993 = vmax.f32 %v964, 0.0
        %v994 = vmax.f32 %v966, 0.0
        %v995 = vmax.f32 %v969, 0.0
        %v996 = vmax.f32 %v971, 0.0
        %v997 = vmax.f32 %v974, 0.0
        %v998 = vmax.f32 %v976, 0.0
        %v999 = vpack.c.bf16 %v983, %v983
        %v1000 = vpack.c.bf16 %v984, %v984
        %v1001 = vpack.c.bf16 %v985, %v985
        %v1002 = vpack.c.bf16 %v986, %v986
        %v1003 = vpack.c.bf16 %v987, %v987
        %v1004 = vpack.c.bf16 %v988, %v988
        %v1005 = vpack.c.bf16 %v989, %v989
        %v1006 = vpack.c.bf16 %v990, %v990
        %v1007 = vpack.c.bf16 %v991, %v991
        %v1008 = vpack.c.bf16 %v992, %v992
        %v1009 = vpack.c.bf16 %v993, %v993
        %v1010 = vpack.c.bf16 %v994, %v994
        %v1011 = vpack.c.bf16 %v995, %v995
        %v1012 = vpack.c.bf16 %v996, %v996
        %v1013 = vpack.c.bf16 %v997, %v997
        %v1014 = vpack.c.bf16 %v998, %v998
        %1015 = vst [vmem:[#allocation2] sm:$0xf] %v999
        %1016 = vst [vmem:[#allocation2 + $0x4] sm:$0xf] %v1000
        %1017 = vst [vmem:[#allocation2 + $0x8] sm:$0xf] %v1001
        %1018 = vst [vmem:[#allocation2 + $0xc] sm:$0xf] %v1002
        %1019 = vst [vmem:[#allocation2 + $0x10] sm:$0xf] %v1003
        %1020 = vst [vmem:[#allocation2 + $0x14] sm:$0xf] %v1004
        %1021 = vst [vmem:[#allocation2 + $0x18] sm:$0xf] %v1005
        %1022 = vst [vmem:[#allocation2 + $0x1c] sm:$0xf] %v1006
        %1023 = vst [vmem:[#allocation2 + $0x20] sm:$0xf] %v1007
        %1024 = vst [vmem:[#allocation2 + $0x24] sm:$0xf] %v1008
        %1025 = vst [vmem:[#allocation2 + $0x28] sm:$0xf] %v1009
        %1026 = vst [vmem:[#allocation2 + $0x2c] sm:$0xf] %v1010
        %1027 = vst [vmem:[#allocation2 + $0x30] sm:$0xf] %v1011
        %1028 = vst [vmem:[#allocation2 + $0x34] sm:$0xf] %v1012
        %1029 = vst [vmem:[#allocation2 + $0x38] sm:$0xf] %v1013
        %1030 = vst [vmem:[#allocation2 + $0x3c] sm:$0xf] %v1014
      $region64: #{ginp_forward.1} parent=55 // pred_fallthru
        _
      // Predicated region
      $region65: #{ginp_forward.1} parent=55 // pred_check
        %p1031 = pneg %p978
      $region66: #{ginp_forward.1} parent=55 // pred_check_branch
        %1033 = sbr.rel (%p1031) target = $region68
      $region67: #{ginp_forward.1} parent=55 // pred_region
        %v1034 = vpack.c.bf16 %v941, %v939
        %v1035 = vpack.c.bf16 %v946, %v944
        %v1036 = vpack.c.bf16 %v951, %v949
        %v1037 = vpack.c.bf16 %v956, %v954
        %v1038 = vpack.c.bf16 %v961, %v959
        %v1039 = vpack.c.bf16 %v966, %v964
        %v1040 = vpack.c.bf16 %v971, %v969
        %v1041 = vpack.c.bf16 %v976, %v974
        %v1042 = vld [vmem:[%s7] sm:$0xf]
        %v1043 = vld [vmem:[%s7 + $0x4] sm:$0xf]
        %v1044 = vld [vmem:[%s7 + $0x8] sm:$0xf]
        %v1045 = vld [vmem:[%s7 + $0xc] sm:$0xf]
        %v1046 = vld [vmem:[%s7 + $0x10] sm:$0xf]
        %v1047 = vld [vmem:[%s7 + $0x14] sm:$0xf]
        %v1048 = vld [vmem:[%s7 + $0x18] sm:$0xf]
        %v1049 = vld [vmem:[%s7 + $0x1c] sm:$0xf]
        %v1050 = vld [vmem:[%s7 + $0x20] sm:$0xf]
        %v1051 = vld [vmem:[%s7 + $0x24] sm:$0xf]
        %v1052 = vld [vmem:[%s7 + $0x28] sm:$0xf]
        %v1053 = vld [vmem:[%s7 + $0x2c] sm:$0xf]
        %v1054 = vld [vmem:[%s7 + $0x30] sm:$0xf]
        %v1055 = vld [vmem:[%s7 + $0x34] sm:$0xf]
        %v1056 = vld [vmem:[%s7 + $0x38] sm:$0xf]
        %v1057 = vld [vmem:[%s7 + $0x3c] sm:$0xf]
        %v1058 = vld [vmem:[%s8] sm:$0x1]
        %v1060 = vperm.slane %v1058, 0
        %v1078 = vunpack.c.l.b16 %v1042
        %v1079 = vunpack.c.l.b16 %v1043
        %v1080 = vunpack.c.l.b16 %v1044
        %v1081 = vunpack.c.l.b16 %v1045
        %v1082 = vunpack.c.l.b16 %v1046
        %v1083 = vunpack.c.l.b16 %v1047
        %v1084 = vunpack.c.l.b16 %v1048
        %v1085 = vunpack.c.l.b16 %v1049
        %v1086 = vunpack.c.l.b16 %v1050
        %v1087 = vunpack.c.l.b16 %v1051
        %v1088 = vunpack.c.l.b16 %v1052
        %v1089 = vunpack.c.l.b16 %v1053
        %v1090 = vunpack.c.l.b16 %v1054
        %v1091 = vunpack.c.l.b16 %v1055
        %v1092 = vunpack.c.l.b16 %v1056
        %v1093 = vunpack.c.l.b16 %v1057
        %v1094 = vpack.c.b16 %v1079, %v1078
        %v1095 = vpack.c.b16 %v1081, %v1080
        %v1096 = vpack.c.b16 %v1083, %v1082
        %v1097 = vpack.c.b16 %v1085, %v1084
        %v1098 = vpack.c.b16 %v1087, %v1086
        %v1099 = vpack.c.b16 %v1089, %v1088
        %v1100 = vpack.c.b16 %v1091, %v1090
        %v1101 = vpack.c.b16 %v1093, %v1092
        %1110 = vmatpush.bf16.msra.mxu0 %v1101
        %1111 = vmatpush.bf16.msra.mxu0 %v1100
        %1112 = vmatpush.bf16.msra.mxu0 %v1099
        %1113 = vmatpush.bf16.msra.mxu0 %v1098
        %1114 = vmatpush.bf16.msra.mxu0 %v1097
        %1115 = vmatpush.bf16.msra.mxu0 %v1096
        %1116 = vmatpush.bf16.msra.mxu0 %v1095
        %1117 = vmatpush.bf16.msra.mxu0 %v1094
        %1118 = vmatmul.bf16.gmra.mxu0 %v1034
        %v1119 = vpop.f32.mrf.mxu0
        %v1120 = vadd.f32 %v1060, %v1119
        %v1121 = vpop.f32.mrf.mxu0
        %v1122 = vadd.f32 %v1060, %v1121
        %1123 = vmatmul.bf16.gmra.mxu0 %v1035
        %v1124 = vpop.f32.mrf.mxu0
        %v1125 = vadd.f32 %v1060, %v1124
        %v1126 = vpop.f32.mrf.mxu0
        %v1127 = vadd.f32 %v1060, %v1126
        %1128 = vmatmul.bf16.gmra.mxu0 %v1036
        %v1129 = vpop.f32.mrf.mxu0
        %v1130 = vadd.f32 %v1060, %v1129
        %v1131 = vpop.f32.mrf.mxu0
        %v1132 = vadd.f32 %v1060, %v1131
        %1133 = vmatmul.bf16.gmra.mxu0 %v1037
        %v1134 = vpop.f32.mrf.mxu0
        %v1135 = vadd.f32 %v1060, %v1134
        %v1136 = vpop.f32.mrf.mxu0
        %v1137 = vadd.f32 %v1060, %v1136
        %1138 = vmatmul.bf16.gmra.mxu0 %v1038
        %v1139 = vpop.f32.mrf.mxu0
        %v1140 = vadd.f32 %v1060, %v1139
        %v1141 = vpop.f32.mrf.mxu0
        %v1142 = vadd.f32 %v1060, %v1141
        %1143 = vmatmul.bf16.gmra.mxu0 %v1039
        %v1144 = vpop.f32.mrf.mxu0
        %v1145 = vadd.f32 %v1060, %v1144
        %v1146 = vpop.f32.mrf.mxu0
        %v1147 = vadd.f32 %v1060, %v1146
        %1148 = vmatmul.bf16.gmra.mxu0 %v1040
        %v1149 = vpop.f32.mrf.mxu0
        %v1150 = vadd.f32 %v1060, %v1149
        %v1151 = vpop.f32.mrf.mxu0
        %v1152 = vadd.f32 %v1060, %v1151
        %1153 = vmatmul.bf16.gmra.mxu0 %v1041
        %v1154 = vpop.f32.mrf.mxu0
        %v1155 = vadd.f32 %v1060, %v1154
        %v1156 = vpop.f32.mrf.mxu0
        %v1157 = vadd.f32 %v1060, %v1156
        %1158 = vdwg.mxu0
        %v1159 = vpack.c.bf16 %v1120, %v1120
        %v1160 = vpack.c.bf16 %v1122, %v1122
        %v1161 = vpack.c.bf16 %v1125, %v1125
        %v1162 = vpack.c.bf16 %v1127, %v1127
        %v1163 = vpack.c.bf16 %v1130, %v1130
        %v1164 = vpack.c.bf16 %v1132, %v1132
        %v1165 = vpack.c.bf16 %v1135, %v1135
        %v1166 = vpack.c.bf16 %v1137, %v1137
        %v1167 = vpack.c.bf16 %v1140, %v1140
        %v1168 = vpack.c.bf16 %v1142, %v1142
        %v1169 = vpack.c.bf16 %v1145, %v1145
        %v1170 = vpack.c.bf16 %v1147, %v1147
        %v1171 = vpack.c.bf16 %v1150, %v1150
        %v1172 = vpack.c.bf16 %v1152, %v1152
        %v1173 = vpack.c.bf16 %v1155, %v1155
        %v1174 = vpack.c.bf16 %v1157, %v1157
        %1175 = vst [vmem:[%s466] sm:$0xf] %v1159
        %1176 = vst [vmem:[%s466 + $0x4] sm:$0xf] %v1160
        %1177 = vst [vmem:[%s466 + $0x8] sm:$0xf] %v1161
        %1178 = vst [vmem:[%s466 + $0xc] sm:$0xf] %v1162
        %1179 = vst [vmem:[%s466 + $0x10] sm:$0xf] %v1163
        %1180 = vst [vmem:[%s466 + $0x14] sm:$0xf] %v1164
        %1181 = vst [vmem:[%s466 + $0x18] sm:$0xf] %v1165
        %1182 = vst [vmem:[%s466 + $0x1c] sm:$0xf] %v1166
        %1183 = vst [vmem:[%s466 + $0x20] sm:$0xf] %v1167
        %1184 = vst [vmem:[%s466 + $0x24] sm:$0xf] %v1168
        %1185 = vst [vmem:[%s466 + $0x28] sm:$0xf] %v1169
        %1186 = vst [vmem:[%s466 + $0x2c] sm:$0xf] %v1170
        %1187 = vst [vmem:[%s466 + $0x30] sm:$0xf] %v1171
        %1188 = vst [vmem:[%s466 + $0x34] sm:$0xf] %v1172
        %1189 = vst [vmem:[%s466 + $0x38] sm:$0xf] %v1173
        %1190 = vst [vmem:[%s466 + $0x3c] sm:$0xf] %v1174
      $region68: #{ginp_forward.1} parent=55 // pred_fallthru
        _
      %p1191 = scmp.lt.s32.totalorder %s24, 1
      %s1192 = scalar_select %p1191, %s24, 1
      %s1193 = smul.addr %s1192, 16
      %s1194 = smul.addr %s1193, 4
      %s1195 = scalar_lea.vmem %s9, %s1194
      // Predicated region
      $region69: #{ginp_forward.1} parent=55 // pred_check
        %p1196 = pneg %p276
      $region70: #{ginp_forward.1} parent=55 // pred_check_branch
        %1198 = sbr.rel (%p1196) target = $region72
      $region71: #{ginp_forward.1} parent=55 // pred_region
        _
      $region72: #{ginp_forward.1} parent=55 // pred_fallthru
        _
    $region56: #{ginp_forward.1} parent=5 // pred_fallthru
      _
    %p1199 = scmp.le.s32.totalorder 2, %s15
    // Predicated region
    $region73: #{ginp_forward.1} parent=5 // pred_check
      %p1200 = pneg %p1199
    $region74: #{ginp_forward.1} parent=5 // pred_check_branch
      %1202 = sbr.rel (%p1200) target = $region76
    $region75: #{ginp_forward.1} parent=5 // pred_region
      %s1203 = ssub.s32 %s15, 2
      // Predicated region
      $region77: #{ginp_forward.1} parent=75 // pred_check
        %p1204 = pneg %p282
      $region78: #{ginp_forward.1} parent=75 // pred_check_branch
        %1206 = sbr.rel (%p1204) target = $region80
      $region79: #{ginp_forward.1} parent=75 // pred_region
        %p1207 = scmp.lt.s32.totalorder %s26, 1
        %s1208 = scalar_select %p1207, %s26, 1
        %s1209 = smul.addr %s1208, 16
        %s1210 = smul.addr %s1209, 4
        %s1211 = scalar_lea.vmem %s9, %s1210
      $region80: #{ginp_forward.1} parent=75 // pred_fallthru
        _
    $region76: #{ginp_forward.1} parent=5 // pred_fallthru
      _
  $region6: #{ginp_forward.1} parent=0 // loop_footer
    %s19 = sadd.s32 1, %s15
  $region7: #{ginp_forward.1} parent=0 // loop_footer_branch
    %14 = sbr.rel target = $region3
  $region8: #{ginp_forward.1} parent=0 // loop_exit
    _

</llo_original>
